<compile_context>
chip_gen: v5e
topology: v5e:2x2
jax: 0.10.0
libtpu: 0.0.40
codegen_flags: <defaults>
</compile_context>

<pallas_src>
import math

import jax
import jax.numpy as jnp
from jax.experimental import pallas as pl
from jax.experimental.pallas import tpu as pltpu

_MIB = 1024 * 1024
_LANE = 128


def make_pos_emb(d_model: int, len_max: int, dtype=jnp.float32) -> jnp.ndarray:
    """Replicates PositionalEncoding.renew(): [len_max, d_model] sinusoidal table.

    Build the table directly in the model compute dtype (e.g. bf16) so the forward pass
    never pays a per-call cast.
    """
    assert d_model % 2 == 0 and d_model >= 4, "d_model must be even and >= 4"
    position = jnp.arange(0, len_max, dtype=jnp.float32)                       # [len_max]
    num_timescales = d_model // 2
    log_timescale_increment = math.log(10000.0) / (num_timescales - 1)
    inv_timescales = jnp.exp(
        jnp.arange(0, num_timescales, dtype=jnp.float32) * -log_timescale_increment
    )                                                                           # [d_model//2]
    scaled_time = position[:, None] * inv_timescales[None, :]                   # [len_max, d//2]
    pos_emb = jnp.concatenate([jnp.sin(scaled_time), jnp.cos(scaled_time)], axis=1)
    return pos_emb.astype(dtype)                                                # [len_max, d_model]


# ---------------------------------------------------------------------------
# Kernel bodies (pure VPU broadcast adds; memory-bound, no MXU)
# ---------------------------------------------------------------------------

def _bcast_add_2d_kernel(word_ref, pos_ref, out_ref):
    # word_ref/out_ref: (tr, tc); pos_ref: (1, tc) — broadcast over the sublane (row) axis.
    out_ref[...] = word_ref[...] + pos_ref[...]


def _bcast_add_3d_kernel(word_ref, pos_ref, out_ref):
    # word_ref/out_ref: (B, ts, D); pos_ref: (ts, D) — broadcast over the batch axis.
    out_ref[...] = word_ref[...] + pos_ref[...][None]


# ---------------------------------------------------------------------------
# VMEM budgeting
# ---------------------------------------------------------------------------

def _round_up(x: int, m: int) -> int:
    return ((x + m - 1) // m) * m


def _vmem_capacity_bytes() -> int:
    try:
        cap = int(pltpu.get_tpu_info().vmem_capacity_bytes)
        if cap > 0:
            return cap
    except Exception:
        pass
    return 64 * _MIB  # conservative fallback (v7x per-TC VMEM)


def _budgets(block_budget_override=None):
    """Returns (live-block byte budget, vmem_limit ceiling) for the current chip.

    v5e/v6e (128 MiB VMEM): ~32 MiB of live blocks, vmem_limit up to 96 MiB.
    v7x     (64  MiB VMEM): ~21 MiB of live blocks, vmem_limit capped at 48 MiB.
    """
    cap = _vmem_capacity_bytes()
    block_budget = min(32 * _MIB, cap // 3)
    if block_budget_override is not None:
        block_budget = int(block_budget_override)
    vmem_ceiling = (cap * 3) // 4
    return block_budget, vmem_ceiling


def _vmem_limit(footprint: int, vmem_ceiling: int) -> int:
    return int(min(max(2 * footprint, 32 * _MIB), vmem_ceiling))


# ---------------------------------------------------------------------------
# Launchers
# ---------------------------------------------------------------------------

def _launch_flat(word2d, pos2d, *, block_budget, vmem_ceiling, donate):
    """out[r, c] = word2d[r, c] + pos2d[0, c] — lane-dense tiling of a 2-D view."""
    R, N = word2d.shape
    dtype = word2d.dtype
    itemsize = jnp.dtype(dtype).itemsize
    sublane = max(8, 32 // itemsize)          # 8 rows f32, 16 bf16, 32 int8/fp8

    # Row block: keep all rows unless very large; ragged row tails are masked.
    tr = R if R <= 1024 else 1024             # 1024 is a multiple of every sublane count
    n_r = pl.cdiv(R, tr)
    tr_pad = _round_up(tr, sublane)

    # Column block: two double-buffered (word, out) blocks plus one double-buffered pos row,
    # all padded to native (sublane, 128) layout, must fit the live-block budget.
    per_col_bytes = 2 * (2 * tr_pad + sublane) * itemsize
    tc_cap = max(_LANE, block_budget // per_col_bytes)
    tc = N if N <= tc_cap else max(_LANE, (tc_cap // _LANE) * _LANE)
    n_c = pl.cdiv(N, tc)                      # ragged column tail is masked on write

    footprint = 2 * (2 * tr_pad + sublane) * _round_up(tc, _LANE) * itemsize

    return pl.pallas_call(
        _bcast_add_2d_kernel,
        out_shape=jax.ShapeDtypeStruct((R, N), dtype),
        grid=(n_c, n_r),  # cols outer, rows inner: pos tile stays resident across rows
        in_specs=[
            pl.BlockSpec((tr, tc), lambda c, r: (r, c)),
            pl.BlockSpec((1, tc), lambda c, r: (0, c)),
        ],
        out_specs=pl.BlockSpec((tr, tc), lambda c, r: (r, c)),
        compiler_params=pltpu.CompilerParams(
            dimension_semantics=("parallel", "parallel"),
            vmem_limit_bytes=_vmem_limit(footprint, vmem_ceiling),
        ),
        input_output_aliases=({0: 0} if donate else {}),
    )(word2d, pos2d)


def _launch_batched_3d(word_emb, pos_slice, *, block_budget, vmem_ceiling, donate):
    """out[b, s, d] = word[b, s, d] + pos[s, d]; whole batch folded into every block."""
    B, S, D = word_emb.shape
    dtype = word_emb.dtype
    itemsize = jnp.dtype(dtype).itemsize
    sublane = max(8, 32 // itemsize)

    # Seq rows per block: 2x double-buffered (word, out) blocks of B batch rows + pos block.
    bytes_per_seq_row = 2 * (2 * B + 1) * D * itemsize
    ts_cap = max(sublane, block_budget // bytes_per_seq_row)
    ts = S if S <= ts_cap else max(sublane, (ts_cap // sublane) * sublane)
    n_s = pl.cdiv(S, ts)                      # ragged seq tail is masked on write

    footprint = 2 * (2 * B + 1) * _round_up(ts, sublane) * D * itemsize

    return pl.pallas_call(
        _bcast_add_3d_kernel,
        out_shape=jax.ShapeDtypeStruct((B, S, D), dtype),
        grid=(n_s,),  # batch folded into the block: n_s grid steps total (was n_s * B)
        in_specs=[
            pl.BlockSpec((B, ts, D), lambda s: (0, s, 0)),
            pl.BlockSpec((ts, D), lambda s: (s, 0)),
        ],
        out_specs=pl.BlockSpec((B, ts, D), lambda s: (0, s, 0)),
        compiler_params=pltpu.CompilerParams(
            dimension_semantics=("parallel",),
            vmem_limit_bytes=_vmem_limit(footprint, vmem_ceiling),
        ),
        input_output_aliases=({0: 0} if donate else {}),
    )(word_emb, pos_slice)


# ---------------------------------------------------------------------------
# Forward (matches PositionalEncoding.forward)
# ---------------------------------------------------------------------------

def positional_encoding_forward(word_emb: jnp.ndarray,
                                pos_emb: jnp.ndarray,
                                t: int | None = None,
                                *,
                                donate_word_emb: bool = False,
                                _block_budget: int | None = None) -> jnp.ndarray:
    """
    word_emb: [B, S, D];  pos_emb: [len_max, D] (precomputed table);  t: static decode step.
    Returns [B, S, D].
    """
    B, S, D = word_emb.shape
    dtype = word_emb.dtype
    itemsize = jnp.dtype(dtype).itemsize
    sublane = max(8, 32 // itemsize)

    # NOTE: mirrors the PyTorch gate (`t if t else ...`): t == 0 (or None) means
    # full-sequence mode — the footgun is preserved on purpose to match the module.
    len_seq = t if t else S

    # Mirrors renew(): grow the table when the requested length exceeds it (static shapes).
    if len_seq > pos_emb.shape[0]:
        pos_emb = make_pos_emb(D, len_seq, pos_emb.dtype)

    # Keep the table in the compute dtype (no-op if it already is — prefer building it there).
    if pos_emb.dtype != dtype:
        pos_emb = pos_emb.astype(dtype)

    block_budget, vmem_ceiling = _budgets(_block_budget)
    common = dict(block_budget=block_budget, vmem_ceiling=vmem_ceiling, donate=donate_word_emb)
    # TODO(synk): buffer donation via input_output_aliases may not propagate through the
    # wrapper-side reshape; harmless numerically, only affects HBM footprint.

    if S == len_seq:
        # Training / full-sequence mode: add pos_emb[:S] broadcast across the batch.
        pos_slice = pos_emb[:S, :]                                              # [S, D]
        # Use batch-folded 3-D blocks when the lane axis (D) is already dense and the whole
        # batch fits the VMEM budget at >= one sublane of sequence rows per block.
        min_fp_3d = 2 * (2 * B + 1) * sublane * D * itemsize
        if D % _LANE == 0 and min_fp_3d <= block_budget:
            return _launch_batched_3d(word_emb, pos_slice, **common)
        # Otherwise flatten (B, S, D) -> (B, S*D): lane-dense output even for small D;
        # pos becomes a single (1, S*D) row broadcast over the batch (sublane) axis.
        out2d = _launch_flat(word_emb.reshape(B, S * D),
                             pos_slice.reshape(1, S * D), **common)
        return out2d.reshape(B, S, D)

    # Decoding mode: add the single row pos_emb[len_seq - 1] to every position.
    # No (S, D) broadcast materialisation — the (1, D) row is broadcast in-kernel over the
    # flattened (B*S, D) rows; the row axis is tiled, so large decode batches pipeline cleanly.
    pos_row = pos_emb[len_seq - 1, :].reshape(1, D)                             # [1, D]
    out2d = _launch_flat(word_emb.reshape(B * S, D), pos_row, **common)
    return out2d.reshape(B, S, D)


if __name__ == "__main__":
    # Small shapes consistent with the module: batch=2, seq=8, d_model=32, len_max=64.
    B, S, D, LEN_MAX = 2, 8, 32, 64
    key = jax.random.PRNGKey(0)
    k1, k2, k3, k4, k5 = jax.random.split(key, 5)

    pos_emb = make_pos_emb(D, LEN_MAX)

    # 1) Full-sequence mode (D=32 -> lane-dense flattened path).
    word_emb = jax.random.normal(k1, (B, S, D), dtype=jnp.float32)
    out = jax.block_until_ready(positional_encoding_forward(word_emb, pos_emb))
    ref = word_emb + pos_emb[:S][None]
    assert out.shape == (B, S, D)
    assert jnp.allclose(out, ref, atol=1e-6, rtol=1e-6), "full-sequence mismatch"

    # 2) Decode step: [B, 1, D] with t=5 adds pos_emb[4].
    word_step = jax.random.normal(k2, (B, 1, D), dtype=jnp.float32)
    out_step = jax.block_until_ready(positional_encoding_forward(word_step, pos_emb, t=5))
    ref_step = word_step + pos_emb[4][None, None]
    assert jnp.allclose(out_step, ref_step, atol=1e-6, rtol=1e-6), "decode (S=1) mismatch"

    # 3) Decode mode with S > 1 and enough rows (256*5 > 1024) to tile + mask the row axis.
    word_dec = jax.random.normal(k3, (256, 5, D), dtype=jnp.float32)
    out_dec = jax.block_until_ready(positional_encoding_forward(word_dec, pos_emb, t=7))
    ref_dec = word_dec + pos_emb[6][None, None]
    assert jnp.allclose(out_dec, ref_dec, atol=1e-6, rtol=1e-6), "decode (S>1) mismatch"

    # 4) d_model multiple of 128 -> batch-folded 3D path; tiny forced budget to exercise
    #    multiple sequence tiles plus a ragged (masked) tail (S=100 not a sublane multiple).
    D2, S2, B2 = 128, 100, 2
    pos2 = make_pos_emb(D2, 128)
    word2 = jax.random.normal(k4, (B2, S2, D2), dtype=jnp.float32)
    out2 = jax.block_until_ready(
        positional_encoding_forward(word2, pos2, _block_budget=64 * 1024))
    ref2 = word2 + pos2[:S2][None]
    assert jnp.allclose(out2, ref2, atol=1e-6, rtol=1e-6), "3D tiled-path mismatch"

    # 5) Flattened path with several 128-wide column tiles and a ragged column tail.
    D3, S3, B3 = 96, 100, 4
    pos3 = make_pos_emb(D3, 128)
    word3 = jax.random.normal(k5, (B3, S3, D3), dtype=jnp.float32)
    out3 = jax.block_until_ready(
        positional_encoding_forward(word3, pos3, _block_budget=64 * 1024))
    ref3 = word3 + pos3[:S3][None]
    assert jnp.allclose(out3, ref3, atol=1e-6, rtol=1e-6), "flattened tiled-path mismatch"

    print("KERNEL_OK")
</pallas_src>

<mosaic_0001>
module attributes {stable_mosaic.version = 11 : i64} {
  func.func @_bcast_add_2d_kernel(%arg0: i32, %arg1: i32, %arg2: memref<2x256xf32, #tpu.memory_space<vmem>>, %arg3: memref<1x256xf32, #tpu.memory_space<vmem>>, %arg4: memref<2x256xf32, #tpu.memory_space<vmem>>) attributes {dimension_semantics = [#tpu.dimension_semantics<parallel>, #tpu.dimension_semantics<parallel>], iteration_bounds = array<i64: 1, 1>, scalar_prefetch = 0 : i64, scratch_operands = 0 : i64, tpu.core_type = #tpu.core_type<tc>, window_params = [{transform_indices = @transform_0, window_bounds = array<i64: 2, 256>}, {transform_indices = @transform_1, window_bounds = array<i64: 1, 256>}, {transform_indices = @transform_2, window_bounds = array<i64: 2, 256>}]} {
    %c0 = arith.constant 0 : index
    %c0_0 = arith.constant 0 : index
    %0 = vector.load %arg2[%c0, %c0_0] : memref<2x256xf32, #tpu.memory_space<vmem>>, vector<2x256xf32>
    %c0_1 = arith.constant 0 : index
    %c0_2 = arith.constant 0 : index
    %1 = vector.load %arg3[%c0_1, %c0_2] : memref<1x256xf32, #tpu.memory_space<vmem>>, vector<1x256xf32>
    %2 = vector.broadcast %1 : vector<1x256xf32> to vector<2x256xf32>
    %3 = arith.addf %0, %2 : vector<2x256xf32>
    %c0_3 = arith.constant 0 : index
    %c0_4 = arith.constant 0 : index
    %4 = vector.load %arg4[%c0_3, %c0_4] : memref<2x256xf32, #tpu.memory_space<vmem>>, vector<2x256xf32>
    tpu.vector_store %arg4[%c0_3, %c0_4], %3 {strides = array<i32>} : memref<2x256xf32, #tpu.memory_space<vmem>>, vector<2x256xf32>,
    return
  }
  func.func @transform_0(%arg0: i32, %arg1: i32) -> (i32, i32) {
    %c0_i32 = arith.constant 0 : i32
    return %arg1, %arg0 : i32, i32
  }
  func.func @transform_1(%arg0: i32, %arg1: i32) -> (i32, i32) {
    %c0_i32 = arith.constant 0 : i32
    %c0_i32_0 = arith.constant 0 : i32
    return %c0_i32, %arg0 : i32, i32
  }
  func.func @transform_2(%arg0: i32, %arg1: i32) -> (i32, i32) {
    %c0_i32 = arith.constant 0 : i32
    return %arg1, %arg0 : i32, i32
  }
}

</mosaic_0001>

<llo_original>
// kernel: tpu_custom_call.1
$region0: #{tpu_custom_call.1}
  #allocation0 [shape = 'u32[]', space=smem, size = 0x4, offset = 0x4, fixed_abs, tag = 'smem constant byte address 0x4 - core index']
  #allocation1 [shape = 'u32[72,128]{1,0:T(1,128)}', space=vmem, size = 0x9000, scoped, tag = 'internal scratch']
  %s0 = inlined_call_operand.hbm [shape: f32[2,256], index: 0, kind: input, shape index: {}]
  %s1 = inlined_call_operand.hbm [shape: f32[1,256], index: 1, kind: input, shape index: {}]
  %s2 = inlined_call_operand.hbm [shape: f32[2,256], index: 2, kind: output, shape index: {}]
  %s3 = sld [smem:[#allocation0]]
  $region26: #{tpu_custom_call.1} parent=0
    _
  %s5 = ssub.s32 1, %s3
  %s6 = scalar_select 0, %s5, %s3
  $region1: #{tpu_custom_call.1} parent=0
    #allocation2 [shape = 'u8[2048]{0}', space=vmem, size = 0x800, scoped, tag = 'input window, operand 0, single buffered']
    #allocation3 [shape = 's32[1]{0}', space=sflag, size = 0x4, scoped, tag = 'scoped memory for tpu_custom_call.1']
    #allocation4 [shape = 's32[1]{0}', space=sflag, size = 0x4, scoped, tag = 'scoped memory for tpu_custom_call.1']
    #allocation5 [shape = 'u8[1024]{0}', space=vmem, size = 0x400, scoped, tag = 'input window, operand 1, single buffered']
    #allocation6 [shape = 's32[1]{0}', space=sflag, size = 0x4, scoped, tag = 'scoped memory for tpu_custom_call.1']
    #allocation7 [shape = 'u8[2048]{0}', space=vmem, size = 0x800, scoped, tag = 'output window, operand 0, single buffered']
    %7 = vsyncpa [#allocation3], 0
    %8 = vsyncpa [#allocation6], 0
    %9 = vsyncpa [#allocation4], 0
    // Predicated region
    $region2: #{tpu_custom_call.1} parent=1 // pred_check
      _
    $region3: #{tpu_custom_call.1} parent=1 // pred_check_branch
      %11 = sbr.rel (0) target = $region5
    $region4: #{tpu_custom_call.1} parent=1 // pred_region
      %13 = vsyncadd [#allocation3], 0
      %s15 = sshll.u32 %s0, 4
      %s16 = int_to_ptr.hbm [resolvable:$true] %s15
      %s17 = sshll.u32 [#allocation2], 4
      %s18 = int_to_ptr.vmem [resolvable:$true] %s17
      %20 = dma.hbm_to_vmem [thread:$0]  %s16, 64, %s18, [#allocation3]
    $region5: #{tpu_custom_call.1} parent=1 // pred_fallthru
      _
    // Predicated region
    $region6: #{tpu_custom_call.1} parent=1 // pred_check
      _
    $region7: #{tpu_custom_call.1} parent=1 // pred_check_branch
      %22 = sbr.rel (0) target = $region9
    $region8: #{tpu_custom_call.1} parent=1 // pred_region
      %24 = vsyncadd [#allocation6], 0
      %s26 = sshll.u32 %s1, 4
      %s27 = int_to_ptr.hbm [resolvable:$true] %s26
      %s28 = sshll.u32 [#allocation5], 4
      %s29 = int_to_ptr.vmem [resolvable:$true] %s28
      %31 = dma.hbm_to_vmem [thread:$0]  %s27, 32, %s29, [#allocation6]
    $region9: #{tpu_custom_call.1} parent=1 // pred_fallthru
      _
    // Predicated region
    $region10: #{tpu_custom_call.1} parent=1 // pred_check
      _
    $region11: #{tpu_custom_call.1} parent=1 // pred_check_branch
      %33 = sbr.rel (0) target = $region13
    $region12: #{tpu_custom_call.1} parent=1 // pred_region
      %35 = dma.done [#allocation3], 64
    $region13: #{tpu_custom_call.1} parent=1 // pred_fallthru
      _
    // Predicated region
    $region14: #{tpu_custom_call.1} parent=1 // pred_check
      _
    $region15: #{tpu_custom_call.1} parent=1 // pred_check_branch
      %37 = sbr.rel (0) target = $region17
    $region16: #{tpu_custom_call.1} parent=1 // pred_region
      %39 = dma.done [#allocation6], 32
    $region17: #{tpu_custom_call.1} parent=1 // pred_fallthru
      _
    %v40 = vld [vmem:[#allocation2] sm:$0xf]
    %v41 = vld [vmem:[#allocation5] sm:$0x3]
    %v43 = vperm.slane %v41, 0
    %v44 = vperm.slane %v41, 1
    %v45 = vrot.slane %v44, 6
    %vm46 = vcmask 1041408
    %v47 = vsel %vm46, %v43, %v45
    %v49 = vadd.f32 %v40, %v47
    %50 = vst [vmem:[#allocation7] sm:$0xf] %v49
    // Predicated region
    $region18: #{tpu_custom_call.1} parent=1 // pred_check
      _
    $region19: #{tpu_custom_call.1} parent=1 // pred_check_branch
      %52 = sbr.rel (0) target = $region21
    $region20: #{tpu_custom_call.1} parent=1 // pred_region
      %54 = vsyncadd [#allocation4], 0
      %s56 = sshll.u32 [#allocation7], 4
      %s57 = int_to_ptr.vmem [resolvable:$true] %s56
      %s58 = sshll.u32 %s2, 4
      %s59 = int_to_ptr.hbm [resolvable:$true] %s58
      %61 = dma.vmem_to_hbm [thread:$0]  %s57, 64, %s59, [#allocation4]
    $region21: #{tpu_custom_call.1} parent=1 // pred_fallthru
      _
    // Predicated region
    $region22: #{tpu_custom_call.1} parent=1 // pred_check
      _
    $region23: #{tpu_custom_call.1} parent=1 // pred_check_branch
      %63 = sbr.rel (0) target = $region25
    $region24: #{tpu_custom_call.1} parent=1 // pred_region
      %65 = dma.done [#allocation4], 64
    $region25: #{tpu_custom_call.1} parent=1 // pred_fallthru
      _
    %66 = vsyncpa [#allocation3], 1
    %67 = vsyncpa [#allocation6], 1
    %68 = vsyncpa [#allocation4], 1

</llo_original>
